<compile_context>
chip_gen: v7x
topology: tpu7x:2x2x1
jax: 0.10.0
libtpu: 0.0.40
codegen_flags: <defaults>
</compile_context>

<pallas_src>
import functools
from math import sqrt

import jax
import jax.numpy as jnp
from jax import lax
from jax.experimental import pallas as pl
from jax.experimental.pallas import tpu as pltpu


# --------------------------- hardware defaults ------------------------------

def _hw_defaults():
    """Pick tile cap / VMEM limit per TPU generation (conservative fallback)."""
    try:
        kind = jax.devices()[0].device_kind.lower()
    except Exception:  # pragma: no cover - e.g. no devices during tracing
        kind = ""
    if "v5 lite" in kind or "v5e" in kind or "v5litepod" in kind:
        return {"tile_cap": 256, "vmem_limit": 96 * 1024 * 1024}
    if "v6" in kind:
        return {"tile_cap": 512, "vmem_limit": 96 * 1024 * 1024}
    # v7x (64 MiB VMEM per TC) or unknown: conservative.
    return {"tile_cap": 256, "vmem_limit": 48 * 1024 * 1024}


def _row_tile(n, cap):
    """Largest multiple-of-8 divisor of n that is <= cap (or n itself)."""
    if n <= cap:
        return n
    t = (min(cap, n) // 8) * 8
    while t >= 8:
        if n % t == 0:
            return t
        t -= 8
    return n  # fallback: no tiling along this axis


def _q_tile(n, cap):
    t = _row_tile(n, cap)
    # Give the "parallel" q axis >= 2 tiles for megacore sharding when N is
    # large enough that the extra pipeline step is negligible.
    if t == n and n >= 256 and (n // 2) % 8 == 0:
        return n // 2
    return t


# ----------------------------- QKV projection -------------------------------

def _qkv_proj_kernel(dim_k, x_ref, w_ref, b_ref, q_ref, k_ref, v_ref):
    """One row-tile of the fused QKV projection (single wide MXU matmul)."""
    proj = jnp.dot(x_ref[...], w_ref[...],
                   preferred_element_type=jnp.float32) + b_ref[...]
    q_ref[...] = proj[:, :dim_k].astype(q_ref.dtype)
    k_ref[...] = proj[:, dim_k:2 * dim_k].astype(k_ref.dtype)
    v_ref[...] = proj[:, 2 * dim_k:].astype(v_ref.dtype)


def _qkv_projection(x, wqkv, bqkv, *, dim_k, dim_v, attn_dtype, tile_cap,
                    vmem_limit):
    N, D = x.shape
    qkv_w = wqkv.shape[1]
    tp = _row_tile(N, tile_cap)
    grid = (N // tp,)

    cost = pl.CostEstimate(
        flops=int(2 * N * D * qkv_w),
        transcendentals=0,
        bytes_accessed=int(N * D * x.dtype.itemsize
                           + qkv_w * (D * wqkv.dtype.itemsize + 4)
                           + N * qkv_w * jnp.dtype(attn_dtype).itemsize))

    grid_spec = pltpu.PrefetchScalarGridSpec(
        num_scalar_prefetch=0,
        grid=grid,
        in_specs=[
            pl.BlockSpec((tp, D), lambda i: (i, 0)),        # x row tile
            pl.BlockSpec((D, qkv_w), lambda i: (0, 0)),     # fused Wqkv (const)
            pl.BlockSpec((1, qkv_w), lambda i: (0, 0)),     # fused bias (const)
        ],
        out_specs=[
            pl.BlockSpec((tp, dim_k), lambda i: (i, 0)),    # Q
            pl.BlockSpec((tp, dim_k), lambda i: (i, 0)),    # K
            pl.BlockSpec((tp, dim_v), lambda i: (i, 0)),    # V
        ],
    )

    return pl.pallas_call(
        functools.partial(_qkv_proj_kernel, dim_k),
        out_shape=(jax.ShapeDtypeStruct((N, dim_k), attn_dtype),
                   jax.ShapeDtypeStruct((N, dim_k), attn_dtype),
                   jax.ShapeDtypeStruct((N, dim_v), attn_dtype)),
        grid_spec=grid_spec,
        compiler_params=pltpu.CompilerParams(
            dimension_semantics=("parallel",),
            vmem_limit_bytes=vmem_limit),
        cost_estimate=cost,
    )(x, wqkv, bqkv)


# --------------------------- flash-style attention --------------------------

def _flash_kernel(norm_fact, dim_v, nums_head,
                  q_ref, k_ref, v_ref, o_ref,
                  m_scr, l_scr, acc_scr):
    """One (q-tile, kv-tile) grid step.

    Grid axis 0: q-row tiles ("parallel").
    Grid axis 1: kv-row tiles ("arbitrary", online-softmax reduction).
    """
    j = pl.program_id(1)

    @pl.when(j == 0)
    def _init():
        m_scr[...] = jnp.full(m_scr.shape, -jnp.inf, jnp.float32)
        l_scr[...] = jnp.zeros(l_scr.shape, jnp.float32)
        acc_scr[...] = jnp.zeros(acc_scr.shape, jnp.float32)

    # Scores [TQ, TKV]: contract last dims of Q and K (no K transpose); bf16
    # operands by default, f32 accumulation on the MXU.
    s = lax.dot_general(q_ref[...], k_ref[...], (((1,), (1,)), ((), ())),
                        preferred_element_type=jnp.float32)

    # Online softmax over the key axis (== dim=1 of the full [N, N] matrix).
    m_prev = m_scr[...]
    m_new = jnp.maximum(m_prev, jnp.max(s, axis=-1, keepdims=True))
    alpha = jnp.exp(m_prev - m_new)
    p = jnp.exp(s - m_new)
    l_scr[...] = alpha * l_scr[...] + jnp.sum(p, axis=-1, keepdims=True)
    acc_scr[...] = alpha * acc_scr[...] + jnp.dot(
        p.astype(v_ref.dtype), v_ref[...], preferred_element_type=jnp.float32)
    m_scr[...] = m_new

    @pl.when(j == pl.num_programs(1) - 1)
    def _finalize():
        inv_l = pl.reciprocal(l_scr[...], approx=True)
        # Scale folded into the small [TQ, dim_v] tile (scalar-associative ->
        # identical math to scaling the attention matrix as in the PyTorch
        # source).
        head = (acc_scr[...] * inv_l * norm_fact).astype(o_ref.dtype)
        # All heads share the same weights -> identical outputs; write each
        # head with a static aligned slice store (no lane-axis concatenate).
        for h in range(nums_head):
            o_ref[:, h * dim_v:(h + 1) * dim_v] = head


def self_attention_multi_head_pallas(x, wq, wk, wv, bq, bk, bv, *,
                                     dim_k, nums_head,
                                     attn_dtype=jnp.bfloat16,
                                     out_dtype=jnp.float32,
                                     tq=None, tkv=None):
    """Forward pass of Self_Attention_Muti_Head.

    x: [N, D] f32.  w*: [D, dim] (already transposed from PyTorch's [out, in]),
    b*: [1, dim].  Returns [N, dim_v * nums_head] in out_dtype.

    attn_dtype=jnp.bfloat16 (default) runs the projection and the two attention
    matmuls on bf16 operands (bf16-native MXU on v5e/v6e/v7x) with f32
    accumulation; attn_dtype=jnp.float32 is the reference-precision path.
    """
    N, D = x.shape
    dim_v = wv.shape[1]
    out_dim = dim_v * nums_head
    norm_fact = 1.0 / sqrt(dim_k)
    hw = _hw_defaults()

    # ---- projection (runs once, outside the (q, kv) attention grid) --------
    wqkv = jnp.concatenate([wq, wk, wv], axis=1).astype(attn_dtype)
    bqkv = jnp.concatenate([bq, bk, bv], axis=1).astype(jnp.float32)
    q, k, v = _qkv_projection(x.astype(attn_dtype), wqkv, bqkv,
                              dim_k=dim_k, dim_v=dim_v,
                              attn_dtype=attn_dtype,
                              tile_cap=hw["tile_cap"],
                              vmem_limit=hw["vmem_limit"])

    # ---- flash attention ----------------------------------------------------
    if tq is None:
        tq = _q_tile(N, hw["tile_cap"])
    if tkv is None:
        tkv = _row_tile(N, hw["tile_cap"])
    assert N % tq == 0 and N % tkv == 0, "N must be divisible by the tile sizes"
    grid = (N // tq, N // tkv)

    isz = jnp.dtype(attn_dtype).itemsize
    osz = jnp.dtype(out_dtype).itemsize
    cost = pl.CostEstimate(
        flops=int(2 * N * N * (dim_k + dim_v)),
        transcendentals=int(N * N + N * grid[1]),
        bytes_accessed=int(N * dim_k * isz                           # Q (once)
                           + grid[0] * N * (dim_k + dim_v) * isz     # K,V / i
                           + N * out_dim * osz))                     # output

    grid_spec = pltpu.PrefetchScalarGridSpec(
        num_scalar_prefetch=0,
        grid=grid,
        in_specs=[
            pl.BlockSpec((tq, dim_k), lambda i, j: (i, 0)),    # Q tile
            pl.BlockSpec((tkv, dim_k), lambda i, j: (j, 0)),   # K tile
            pl.BlockSpec((tkv, dim_v), lambda i, j: (j, 0)),   # V tile
        ],
        out_specs=pl.BlockSpec((tq, out_dim), lambda i, j: (i, 0)),
        scratch_shapes=[
            pltpu.VMEM((tq, 1), jnp.float32),       # running max
            pltpu.VMEM((tq, 1), jnp.float32),       # running sum
            pltpu.VMEM((tq, dim_v), jnp.float32),   # output accumulator
        ],
    )

    kernel = functools.partial(_flash_kernel, norm_fact, dim_v, nums_head)
    return pl.pallas_call(
        kernel,
        out_shape=jax.ShapeDtypeStruct((N, out_dim), out_dtype),
        grid_spec=grid_spec,
        compiler_params=pltpu.CompilerParams(
            dimension_semantics=("parallel", "arbitrary"),
            vmem_limit_bytes=hw["vmem_limit"]),
        cost_estimate=cost,
    )(q, k, v)


# ----------------------------- test harness --------------------------------

def xavier_normal(key, fan_out, fan_in):
    std = sqrt(2.0 / (fan_in + fan_out))
    # PyTorch stores Linear weight as [out, in]; return transposed [in, out].
    w = std * jax.random.normal(key, (fan_out, fan_in), dtype=jnp.float32)
    return w.T


def make_params(key, input_dim, dim_k, dim_v):
    kq, kk, kv = jax.random.split(key, 3)
    wq = xavier_normal(kq, dim_k, input_dim)
    wk = xavier_normal(kk, dim_k, input_dim)
    wv = xavier_normal(kv, dim_v, input_dim)
    bq = jnp.zeros((1, dim_k), jnp.float32)
    bk = jnp.zeros((1, dim_k), jnp.float32)
    bv = jnp.zeros((1, dim_v), jnp.float32)
    return wq, wk, wv, bq, bk, bv


def reference(x, params, nums_head, dim_k):
    wq, wk, wv, bq, bk, bv = params
    q = x @ wq + bq
    k = x @ wk + bk
    v = x @ wv + bv
    atten = jax.nn.softmax(q @ k.T, axis=1) * (1.0 / sqrt(dim_k))
    out = atten @ v
    return jnp.concatenate([out] * nums_head, axis=1)


if __name__ == "__main__":
    # Small shapes consistent with the module: x is 2-D [seq, input_dim].
    N, input_dim, dim_k, dim_v, nums_head = 8, 32, 16, 16, 4
    assert dim_k % nums_head == 0 and dim_v % nums_head == 0

    key = jax.random.PRNGKey(0)
    kx, kp = jax.random.split(key)
    x = jax.random.normal(kx, (N, input_dim), dtype=jnp.float32)
    params = make_params(kp, input_dim, dim_k, dim_v)

    ref = reference(x, params, nums_head, dim_k)

    # Reference-precision path (f32 matmul operands).
    out32 = self_attention_multi_head_pallas(
        x, *params, dim_k=dim_k, nums_head=nums_head, attn_dtype=jnp.float32)
    out32 = jax.block_until_ready(out32)
    assert out32.shape == (N, dim_v * nums_head), out32.shape
    # tolerance accounts for the approximate EUP reciprocal in the softmax.
    assert jnp.allclose(out32, ref, atol=2e-3, rtol=2e-3), "f32 path mismatch"

    # Default fast path: bf16 operands for the MXU matmuls, f32 accumulation.
    out_bf16 = self_attention_multi_head_pallas(
        x, *params, dim_k=dim_k, nums_head=nums_head)
    out_bf16 = jax.block_until_ready(out_bf16)
    assert out_bf16.shape == (N, dim_v * nums_head)
    assert bool(jnp.all(jnp.isfinite(out_bf16)))
    assert jnp.allclose(out_bf16, ref, atol=1e-1, rtol=1e-1), "bf16 path mismatch"

    print("KERNEL_OK")
</pallas_src>

<mosaic_0001>
module attributes {stable_mosaic.version = 11 : i64} {
  func.func @_qkv_proj_kernel(%arg0: i32, %arg1: memref<8x32xf32, #tpu.memory_space<vmem>>, %arg2: memref<32x48xf32, #tpu.memory_space<vmem>>, %arg3: memref<1x48xf32, #tpu.memory_space<vmem>>, %arg4: memref<8x16xf32, #tpu.memory_space<vmem>>, %arg5: memref<8x16xf32, #tpu.memory_space<vmem>>, %arg6: memref<8x16xf32, #tpu.memory_space<vmem>>) attributes {dimension_semantics = [#tpu.dimension_semantics<parallel>], iteration_bounds = array<i64: 1>, scalar_prefetch = 0 : i64, scratch_operands = 0 : i64, tpu.core_type = #tpu.core_type<tc>, window_params = [{transform_indices = @transform_0, window_bounds = array<i64: 8, 32>}, {pipeline_mode = #tpu.pipeline_mode<synchronous>, transform_indices = @transform_1, window_bounds = array<i64: 32, 48>}, {pipeline_mode = #tpu.pipeline_mode<synchronous>, transform_indices = @transform_2, window_bounds = array<i64: 1, 48>}, {transform_indices = @transform_3, window_bounds = array<i64: 8, 16>}, {transform_indices = @transform_4, window_bounds = array<i64: 8, 16>}, {transform_indices = @transform_5, window_bounds = array<i64: 8, 16>}]} {
    %c0 = arith.constant 0 : index
    %c0_0 = arith.constant 0 : index
    %0 = vector.load %arg1[%c0, %c0_0] : memref<8x32xf32, #tpu.memory_space<vmem>>, vector<8x32xf32>
    %c0_1 = arith.constant 0 : index
    %c0_2 = arith.constant 0 : index
    %1 = vector.load %arg2[%c0_1, %c0_2] : memref<32x48xf32, #tpu.memory_space<vmem>>, vector<32x48xf32>
    %cst = arith.constant dense<0.000000e+00> : vector<8x48xf32>
    %2 = tpu.matmul %0, %1, %cst {dimension_numbers = #tpu.dot_dimension_numbers<[1], [0], [0], [1], [0, 0, 1, 1], [], []>} : vector<8x32xf32>, vector<32x48xf32>, vector<8x48xf32> -> vector<8x48xf32>
    %c0_3 = arith.constant 0 : index
    %c0_4 = arith.constant 0 : index
    %3 = vector.load %arg3[%c0_3, %c0_4] : memref<1x48xf32, #tpu.memory_space<vmem>>, vector<1x48xf32>
    %4 = vector.broadcast %3 : vector<1x48xf32> to vector<8x48xf32>
    %5 = arith.addf %2, %4 : vector<8x48xf32>
    %6 = vector.extract_strided_slice %5 {offsets = [0, 0], sizes = [8, 16], strides = [1, 1]} : vector<8x48xf32> to vector<8x16xf32>
    %c0_5 = arith.constant 0 : index
    %c0_6 = arith.constant 0 : index
    %7 = vector.load %arg4[%c0_5, %c0_6] : memref<8x16xf32, #tpu.memory_space<vmem>>, vector<8x16xf32>
    tpu.vector_store %arg4[%c0_5, %c0_6], %6 {strides = array<i32>} : memref<8x16xf32, #tpu.memory_space<vmem>>, vector<8x16xf32>,
    %8 = vector.extract_strided_slice %5 {offsets = [0, 16], sizes = [8, 16], strides = [1, 1]} : vector<8x48xf32> to vector<8x16xf32>
    %c0_7 = arith.constant 0 : index
    %c0_8 = arith.constant 0 : index
    %9 = vector.load %arg5[%c0_7, %c0_8] : memref<8x16xf32, #tpu.memory_space<vmem>>, vector<8x16xf32>
    tpu.vector_store %arg5[%c0_7, %c0_8], %8 {strides = array<i32>} : memref<8x16xf32, #tpu.memory_space<vmem>>, vector<8x16xf32>,
    %10 = vector.extract_strided_slice %5 {offsets = [0, 32], sizes = [8, 16], strides = [1, 1]} : vector<8x48xf32> to vector<8x16xf32>
    %c0_9 = arith.constant 0 : index
    %c0_10 = arith.constant 0 : index
    %11 = vector.load %arg6[%c0_9, %c0_10] : memref<8x16xf32, #tpu.memory_space<vmem>>, vector<8x16xf32>
    tpu.vector_store %arg6[%c0_9, %c0_10], %10 {strides = array<i32>} : memref<8x16xf32, #tpu.memory_space<vmem>>, vector<8x16xf32>,
    return
  }
  func.func @transform_0(%arg0: i32) -> (i32, i32) {
    %c0_i32 = arith.constant 0 : i32
    %c0_i32_0 = arith.constant 0 : i32
    return %arg0, %c0_i32 : i32, i32
  }
  func.func @transform_1(%arg0: i32) -> (i32, i32) {
    %c0_i32 = arith.constant 0 : i32
    %c0_i32_0 = arith.constant 0 : i32
    %c0_i32_1 = arith.constant 0 : i32
    return %c0_i32, %c0_i32_0 : i32, i32
  }
  func.func @transform_2(%arg0: i32) -> (i32, i32) {
    %c0_i32 = arith.constant 0 : i32
    %c0_i32_0 = arith.constant 0 : i32
    %c0_i32_1 = arith.constant 0 : i32
    return %c0_i32, %c0_i32_0 : i32, i32
  }
  func.func @transform_3(%arg0: i32) -> (i32, i32) {
    %c0_i32 = arith.constant 0 : i32
    %c0_i32_0 = arith.constant 0 : i32
    return %arg0, %c0_i32 : i32, i32
  }
  func.func @transform_4(%arg0: i32) -> (i32, i32) {
    %c0_i32 = arith.constant 0 : i32
    %c0_i32_0 = arith.constant 0 : i32
    return %arg0, %c0_i32 : i32, i32
  }
  func.func @transform_5(%arg0: i32) -> (i32, i32) {
    %c0_i32 = arith.constant 0 : i32
    %c0_i32_0 = arith.constant 0 : i32
    return %arg0, %c0_i32 : i32, i32
  }
}

</mosaic_0001>

<llo_original>
// kernel: tpu_custom_call.1
$region0: #{tpu_custom_call.1}
  #allocation0 [shape = 'u32[]', space=smem, size = 0x4, offset = 0x4, fixed_abs, tag = 'smem constant byte address 0x4 - core index']
  #allocation1 [shape = 'u32[144,128]{1,0:T(1,128)}', space=vmem, size = 0x12000, scoped, tag = 'internal scratch']
  %s0 = inlined_call_operand.hbm [shape: f32[8,32], index: 0, kind: input, shape index: {}]
  %s1 = inlined_call_operand.hbm [shape: f32[32,48], index: 1, kind: input, shape index: {}]
  %s2 = inlined_call_operand.vmem [shape: f32[1,48], index: 2, kind: input, shape index: {}]
  %s3 = inlined_call_operand.hbm [shape: f32[8,16], index: 3, kind: output, shape index: {0}]
  %s4 = inlined_call_operand.hbm [shape: f32[8,16], index: 4, kind: output, shape index: {1}]
  %s5 = inlined_call_operand.hbm [shape: f32[8,16], index: 5, kind: output, shape index: {2}]
  %6 = xla_tuple %s3, %s4, %s5
  %s7 = sld [smem:[#allocation0]]
  $region46: #{tpu_custom_call.1} parent=0
    _
  %s9 = ssub.s32 1, %s7
  %s10 = scalar_select 0, %s9, %s7
  $region1: #{tpu_custom_call.1} parent=0
    #allocation2 [shape = 'u8[4096]{0}', space=vmem, size = 0x1000, scoped, tag = 'input window, operand 0, single buffered']
    #allocation3 [shape = 's32[1]{0}', space=sflag, size = 0x4, scoped, tag = 'scoped memory for tpu_custom_call.1']
    #allocation4 [shape = 's32[1]{0}', space=sflag, size = 0x4, scoped, tag = 'scoped memory for tpu_custom_call.1']
    #allocation5 [shape = 'u8[16384]{0}', space=vmem, size = 0x4000, scoped, tag = 'input window, operand 1, single buffered']
    #allocation6 [shape = 's32[1]{0}', space=sflag, size = 0x4, scoped, tag = 'scoped memory for tpu_custom_call.1']
    #allocation7 [shape = 'u8[4096]{0}', space=vmem, size = 0x1000, scoped, tag = 'output window, operand 0, single buffered']
    #allocation8 [shape = 'u8[4096]{0}', space=vmem, size = 0x1000, scoped, tag = 'output window, operand 1, single buffered']
    #allocation9 [shape = 's32[1]{0}', space=sflag, size = 0x4, scoped, tag = 'scoped memory for tpu_custom_call.1']
    #allocation10 [shape = 'u8[4096]{0}', space=vmem, size = 0x1000, scoped, tag = 'output window, operand 2, single buffered']
    %11 = vsyncpa [#allocation3], 0
    %12 = vsyncpa [#allocation6], 0
    %13 = vsyncpa [#allocation4], 0
    %14 = vsyncpa [#allocation9], 0
    // Predicated region
    $region2: #{tpu_custom_call.1} parent=1 // pred_check
      _
    $region3: #{tpu_custom_call.1} parent=1 // pred_check_branch
      %16 = sbr.rel (0) target = $region5
    $region4: #{tpu_custom_call.1} parent=1 // pred_region
      %s18 = ssub.s32 128, 128
      %19 = vsyncadd [#allocation3], %s18
      %s21 = sshll.u32 [#allocation2], 4
      %s22 = int_to_ptr.vmem [resolvable:$true] %s21
      %24 = dma.hbm_to_vmem [thread:$0]  %s0, 128, %s22, [#allocation3]
    $region5: #{tpu_custom_call.1} parent=1 // pred_fallthru
      _
    // Predicated region
    $region6: #{tpu_custom_call.1} parent=1 // pred_check
      _
    $region7: #{tpu_custom_call.1} parent=1 // pred_check_branch
      %26 = sbr.rel (0) target = $region9
    $region8: #{tpu_custom_call.1} parent=1 // pred_region
      %s28 = ssub.s32 512, 512
      %29 = vsyncadd [#allocation6], %s28
      %s30 = sshll.u32 [#allocation5], 4
      %s31 = int_to_ptr.vmem [resolvable:$true] %s30
      %36 = dma.hbm_to_vmem [thread:$0]  %s1, 512, %s31, [#allocation6], 128, 128, 8
    $region9: #{tpu_custom_call.1} parent=1 // pred_fallthru
      _
    // Predicated region
    $region10: #{tpu_custom_call.1} parent=1 // pred_check
      _
    $region11: #{tpu_custom_call.1} parent=1 // pred_check_branch
      %38 = sbr.rel (0) target = $region13
    $region12: #{tpu_custom_call.1} parent=1 // pred_region
      _
    $region13: #{tpu_custom_call.1} parent=1 // pred_fallthru
      _
    // Predicated region
    $region14: #{tpu_custom_call.1} parent=1 // pred_check
      _
    $region15: #{tpu_custom_call.1} parent=1 // pred_check_branch
      %40 = sbr.rel (0) target = $region17
    $region16: #{tpu_custom_call.1} parent=1 // pred_region
      %41 = dma.done [#allocation3], 128
    $region17: #{tpu_custom_call.1} parent=1 // pred_fallthru
      _
    // Predicated region
    $region18: #{tpu_custom_call.1} parent=1 // pred_check
      _
    $region19: #{tpu_custom_call.1} parent=1 // pred_check_branch
      %43 = sbr.rel (0) target = $region21
    $region20: #{tpu_custom_call.1} parent=1 // pred_region
      %44 = dma.done [#allocation6], 512
    $region21: #{tpu_custom_call.1} parent=1 // pred_fallthru
      _
    %v45 = vld [vmem:[#allocation2] sm:$0xff]
    %v46 = vld [vmem:[#allocation5] sm:$0xff]
    %v47 = vld [vmem:[#allocation5 + $0x8] sm:$0xff]
    %v48 = vld [vmem:[#allocation5 + $0x10] sm:$0xff]
    %v49 = vld [vmem:[#allocation5 + $0x18] sm:$0xff]
    %v50 = vld [vmem:[%s2] sm:$0x1]
    %v52 = vlaneseq
    %v53 = vshrl.u32 %v52, 7
    %v54 = vsub.s32 0, %v53
    %v55 = vrot.slane %v50, %v54
    %vm57 = vcmask 261120
    %v59 = vsel %vm57, %v45, 0
    %61 = vmatprep.subr.mxu0 0.0
    %62 = vmatpush1.msra.mxu0 %v46
    %63 = vmatprep.subr.mxu0 0.0
    %64 = vmatpush1.msra.mxu0 %v47
    %65 = vmatprep.subr.mxu0 0.0
    %66 = vmatpush1.msra.mxu0 %v48
    %67 = vmatprep.subr.mxu0 0.0
    %68 = vmatpush1.msra.mxu0 %v49
    %69 = vmatprep.subr.mxu0 0.0
    %70 = vmatpush1.msra.mxu0 0.0
    %71 = vmatprep.subr.mxu0 0.0
    %72 = vmatpush1.msra.mxu0 0.0
    %73 = vmatprep.subr.mxu0 0.0
    %74 = vmatpush1.msra.mxu0 0.0
    %75 = vmatprep.subr.mxu0 0.0
    %76 = vmatpush1.msra.mxu0 0.0
    %77 = vmatprep.subr.mxu0 0.0
    %78 = vmatpush1.msra.mxu0 0.0
    %79 = vmatprep.subr.mxu0 0.0
    %80 = vmatpush1.msra.mxu0 0.0
    %81 = vmatprep.subr.mxu0 0.0
    %82 = vmatpush1.msra.mxu0 0.0
    %83 = vmatprep.subr.mxu0 0.0
    %84 = vmatpush1.msra.mxu0 0.0
    %85 = vmatprep.subr.mxu0 0.0
    %86 = vmatpush1.msra.mxu0 0.0
    %87 = vmatprep.subr.mxu0 0.0
    %88 = vmatpush1.msra.mxu0 0.0
    %89 = vmatprep.subr.mxu0 0.0
    %90 = vmatpush1.msra.mxu0 0.0
    %91 = vmatprep.subr.mxu0 0.0
    %92 = vmatpush1.msra.mxu0 0.0
    %93 = vmatprep.subr.mxu0 0.0
    %94 = vmatpush1.msra.mxu0 0.0
    %95 = vmatprep.subr.mxu0 0.0
    %96 = vmatpush1.msra.mxu0 0.0
    %97 = vmatprep.subr.mxu0 0.0
    %98 = vmatpush1.msra.mxu0 0.0
    %99 = vmatprep.subr.mxu0 0.0
    %100 = vmatpush1.msra.mxu0 0.0
    %101 = vmatprep.subr.mxu0 0.0
    %102 = vmatpush1.msra.mxu0 0.0
    %103 = vmatprep.subr.mxu0 0.0
    %104 = vmatpush1.msra.mxu0 0.0
    %105 = vmatprep.subr.mxu0 0.0
    %106 = vmatpush1.msra.mxu0 0.0
    %107 = vmatprep.subr.mxu0 0.0
    %108 = vmatpush1.msra.mxu0 0.0
    %109 = vmatprep.subr.mxu0 0.0
    %110 = vmatpush1.msra.mxu0 0.0
    %111 = vmatprep.subr.mxu0 0.0
    %112 = vmatpush1.msra.mxu0 0.0
    %113 = vmatprep.subr.mxu0 0.0
    %114 = vmatpush1.msra.mxu0 0.0
    %115 = vmatprep.subr.mxu0 0.0
    %116 = vmatpush1.msra.mxu0 0.0
    %117 = vmatprep.subr.mxu0 0.0
    %118 = vmatpush1.msra.mxu0 0.0
    %119 = vmatprep.subr.mxu0 0.0
    %120 = vmatpush1.msra.mxu0 0.0
    %121 = vmatprep.subr.mxu0 0.0
    %122 = vmatpush1.msra.mxu0 0.0
    %123 = vmatprep.subr.mxu0 0.0
    %124 = vmatpush1.msra.mxu0 0.0
    %125 = vmatprep.mubr.f32.mxu0 0.0
    %126 = vmatmul.mubr.f32.gmra.mrb[0].mxu0 %v59
    %v127 = vpop.f32.mrb[0].mxu0
    %v128 = vadd.f32 %v55, %v127
    %v129 = vpop.f32.mrb[0].mxu0
    %130 = vdwg.mxu0
    %vm131 = vcmask 130048
    %132 = vst.msk [vmem:[#allocation7] sm:$0xff] %vm131, %v128
    %134 = vrot.lane.b32.xlu0 %v128, 112
    %v135 = vpop.permute.xlu0 %134
    %137 = vst.msk [vmem:[#allocation8] sm:$0xff] %vm131, %v135
    %138 = vrot.lane.b32.xlu0 %v128, 96
    %v139 = vpop.permute.xlu0 %138
    %141 = vst.msk [vmem:[#allocation10] sm:$0xff] %vm131, %v139
    // Predicated region
    $region22: #{tpu_custom_call.1} parent=1 // pred_check
      _
    $region23: #{tpu_custom_call.1} parent=1 // pred_check_branch
      %143 = sbr.rel (0) target = $region25
    $region24: #{tpu_custom_call.1} parent=1 // pred_region
      %s145 = ssub.s32 128, 128
      %146 = vsyncadd [#allocation4], %s145
      %s148 = sshll.u32 [#allocation7], 4
      %s149 = int_to_ptr.vmem [resolvable:$true] %s148
      %151 = dma.vmem_to_hbm [thread:$0]  %s149, 128, %s3, [#allocation4]
    $region25: #{tpu_custom_call.1} parent=1 // pred_fallthru
      _
    // Predicated region
    $region26: #{tpu_custom_call.1} parent=1 // pred_check
      _
    $region27: #{tpu_custom_call.1} parent=1 // pred_check_branch
      %153 = sbr.rel (0) target = $region29
    $region28: #{tpu_custom_call.1} parent=1 // pred_region
      %s155 = ssub.s32 128, 128
      %156 = vsyncadd [#allocation9], %s155
      %s158 = sshll.u32 [#allocation8], 4
      %s159 = int_to_ptr.vmem [resolvable:$true] %s158
      %161 = dma.vmem_to_hbm [thread:$0]  %s159, 128, %s4, [#allocation9]
    $region29: #{tpu_custom_call.1} parent=1 // pred_fallthru
      _
    // Predicated region
    $region30: #{tpu_custom_call.1} parent=1 // pred_check
      _
    $region31: #{tpu_custom_call.1} parent=1 // pred_check_branch
      %163 = sbr.rel (0) target = $region33
    $region32: #{tpu_custom_call.1} parent=1 // pred_region
      %s165 = ssub.s32 128, 128
      %166 = vsyncadd [#allocation9], %s165
      %s168 = sshll.u32 [#allocation10], 4
      %s169 = int_to_ptr.vmem [resolvable:$true] %s168
      %171 = dma.vmem_to_hbm [thread:$0]  %s169, 128, %s5, [#allocation9]
    $region33: #{tpu_custom_call.1} parent=1 // pred_fallthru
      _
    // Predicated region
    $region34: #{tpu_custom_call.1} parent=1 // pred_check
      _
    $region35: #{tpu_custom_call.1} parent=1 // pred_check_branch
      %173 = sbr.rel (0) target = $region37
    $region36: #{tpu_custom_call.1} parent=1 // pred_region
      %174 = dma.done [#allocation4], 128
    $region37: #{tpu_custom_call.1} parent=1 // pred_fallthru
      _
    // Predicated region
    $region38: #{tpu_custom_call.1} parent=1 // pred_check
      _
    $region39: #{tpu_custom_call.1} parent=1 // pred_check_branch
      %176 = sbr.rel (0) target = $region41
    $region40: #{tpu_custom_call.1} parent=1 // pred_region
      %177 = dma.done [#allocation9], 128
    $region41: #{tpu_custom_call.1} parent=1 // pred_fallthru
      _
    // Predicated region
    $region42: #{tpu_custom_call.1} parent=1 // pred_check
      _
    $region43: #{tpu_custom_call.1} parent=1 // pred_check_branch
      %179 = sbr.rel (0) target = $region45
    $region44: #{tpu_custom_call.1} parent=1 // pred_region
      %180 = dma.done [#allocation9], 128
    $region45: #{tpu_custom_call.1} parent=1 // pred_fallthru
      _
    %181 = vsyncpa [#allocation3], 1
    %182 = vsyncpa [#allocation6], 1
    %183 = vsyncpa [#allocation4], 1
    %184 = vsyncpa [#allocation9], 1

</llo_original>
